<compile_context>
chip_gen: v5e
topology: v5e:2x2
jax: 0.10.0
libtpu: 0.0.40
codegen_flags: <defaults>
</compile_context>

<pallas_src>
import functools

import jax
import jax.numpy as jnp
from jax.experimental import pallas as pl
from jax.experimental.pallas import tpu as pltpu

_LANE = 128
_SUBLANE = 8


def _round_up(v: int, m: int) -> int:
    return (v + m - 1) // m * m


def _choose_batch_tile(rows: int, block_b: int):
    """Pick (batch_tile, grid_steps) for `rows` batch rows."""
    rows = _round_up(max(rows, 1), _SUBLANE)
    block_b = max(_SUBLANE, _round_up(block_b, _SUBLANE))
    if rows <= block_b:
        return rows, 1                       # single grid step for small B
    # B > block_b: split into roughly-equal tiles. Keeps grid_b >= 2 so the
    # "parallel" axis shards across both v7x TensorCores and avoids a
    # mostly-padding trailing tile.
    grid_b = -(-rows // block_b)
    bb = _round_up(-(-rows // grid_b), _SUBLANE)
    grid_b = -(-rows // bb)
    return bb, grid_b


def _memory_module_kernel(x_ref, wug_ref, bug_ref, mem_ref, wmc_ref, bmc_ref, o_ref):
    """One batch tile of the MemoryModule forward (all dims lane-dense / padded).

    x_ref   : (TB, Hp)  input activations
    wug_ref : (Hp, Mp)  update_gate weight, pre-transposed to (in, out)
    bug_ref : (1,  Mp)  update_gate bias (f32)
    mem_ref : (Mp, Hp)  memory parameter
    wmc_ref : (Hp, Hp)  memory_controller weight, pre-transposed to (in, out)
    bmc_ref : (1,  Hp)  memory_controller bias (f32)
    o_ref   : (TB, Hp)  output
    """
    mxu_dtype = wug_ref.dtype
    x = x_ref[...].astype(mxu_dtype)

    # update_gate: Linear(H -> M) + sigmoid. MXU in the weight dtype, f32
    # accumulation; bias + gate math in f32 on the VPU/EUP.
    # sigmoid(z) = 0.5*(tanh(z/2)+1): a single EUP push per element (v7x is
    # EUP-bound at large B; an exp+reciprocal lowering would be two pushes).
    logits = jnp.dot(x, wug_ref[...], preferred_element_type=jnp.float32) + bug_ref[...]
    update_weights = 0.5 * (jnp.tanh(0.5 * logits) + 1.0)

    # memory read: (TB, Mp) @ (Mp, Hp) -> (TB, Hp).
    memory_update = jnp.dot(update_weights.astype(mem_ref.dtype), mem_ref[...],
                            preferred_element_type=jnp.float32)

    # memory_controller: Linear(H -> H) + tanh. memory_update stays f32 (only
    # one bf16 activation round-trip in the whole chain); W_mc remains bf16 in
    # HBM and is upcast in VMEM (no extra HBM traffic).
    ctrl = jnp.dot(memory_update, wmc_ref[...].astype(jnp.float32),
                   preferred_element_type=jnp.float32) + bmc_ref[...]
    o_ref[...] = jnp.tanh(ctrl).astype(o_ref.dtype)


def prepare_memory_module_params(memory, w_ug, b_ug, w_mc, b_mc,
                                 *, compute_dtype=jnp.bfloat16):
    """Pad + cast the MemoryModule parameters ONCE into the lane-dense layout
    the kernel consumes (PyTorch (out, in) Linear weights transposed to
    (in, out)). Call at parameter-load time, not per forward call.

    memory : (M, H)      w_ug : (M, H)   b_ug : (M,)
                          w_mc : (H, H)   b_mc : (H,)

    The zero padding is load-bearing: if these arrays are stored persistently,
    the pad regions must stay zeroed.
    """
    memory = jnp.asarray(memory)
    M, H = memory.shape
    Hp, Mp = _round_up(H, _LANE), _round_up(M, _LANE)
    f32 = jnp.float32
    wug_p = jnp.zeros((Hp, Mp), compute_dtype).at[:H, :M].set(
        jnp.asarray(w_ug).T.astype(compute_dtype))
    bug_p = jnp.zeros((1, Mp), f32).at[0, :M].set(jnp.asarray(b_ug).reshape(M).astype(f32))
    mem_p = jnp.zeros((Mp, Hp), compute_dtype).at[:M, :H].set(memory.astype(compute_dtype))
    wmc_p = jnp.zeros((Hp, Hp), compute_dtype).at[:H, :H].set(
        jnp.asarray(w_mc).T.astype(compute_dtype))
    bmc_p = jnp.zeros((1, Hp), f32).at[0, :H].set(jnp.asarray(b_mc).reshape(H).astype(f32))
    return (wug_p, bug_p, mem_p, wmc_p, bmc_p)


def _forward_padded_impl(x, wug_p, bug_p, mem_p, wmc_p, bmc_p,
                         *, block_b, out_dtype, single_buffer_weights):
    B, Hp = x.shape
    Mp = mem_p.shape[0]
    assert Hp % _LANE == 0 and Mp % _LANE == 0, "params must be lane-dense padded"
    assert wug_p.shape == (Hp, Mp) and wmc_p.shape == (Hp, Hp)
    assert bug_p.shape == (1, Mp) and bmc_p.shape == (1, Hp)
    out_dtype = jnp.dtype(x.dtype if out_dtype is None else out_dtype)

    bb, grid_b = _choose_batch_tile(B, block_b)
    Bp = bb * grid_b
    if Bp != B:
        x = jnp.zeros((Bp, Hp), x.dtype).at[:B].set(x)

    in_isz = jnp.dtype(x.dtype).itemsize
    w_isz = jnp.dtype(wug_p.dtype).itemsize
    out_isz = out_dtype.itemsize
    w_elems = Hp * Mp + Mp * Hp + Hp * Hp

    # Advisory cost estimate so XLA can schedule around the custom call.
    cost = pl.CostEstimate(
        flops=2 * Bp * (Hp * Mp + Mp * Hp + Hp * Hp),
        transcendentals=Bp * (Mp + Hp),                         # gate tanh + output tanh
        bytes_accessed=(Bp * Hp * (in_isz + out_isz)
                        + w_elems * w_isz + (Mp + Hp) * 4),
    )

    # Explicit VMEM budget: double-buffered x/out tiles, weights + biases
    # (x2 unless single-buffered), and the f32 intermediates that ARE
    # materialized at large bb (logits/gate, memory_update/ctrl, f32 W_mc copy).
    # Clamp to [32 MiB, 64 MiB]: generous on v5e/v6e (128 MiB physical), never
    # above v7x's 64 MiB physical.
    wbuf = 1 if single_buffer_weights else 2
    est = (2 * bb * Hp * (in_isz + out_isz)
           + wbuf * (w_elems * w_isz + (Mp + Hp) * 4)
           + bb * (2 * Mp + 2 * Hp) * 4
           + Hp * Hp * 4)
    vmem_limit = int(min(max(2 * est + (4 << 20), 32 << 20), 64 << 20))

    def _const_spec(shape):
        if single_buffer_weights:
            # Constant index_maps are never re-DMA'd between grid steps, but
            # Pallas still double-buffers them by default; single-buffering
            # frees that VMEM for larger batch tiles at production H on v7x.
            return pl.BlockSpec(shape, lambda i: (0, 0), pipeline_mode=pl.Buffered(1))
        return pl.BlockSpec(shape, lambda i: (0, 0))

    out_p = pl.pallas_call(
        _memory_module_kernel,
        out_shape=jax.ShapeDtypeStruct((Bp, Hp), out_dtype),
        grid_spec=pltpu.PrefetchScalarGridSpec(
            num_scalar_prefetch=0,
            grid=(grid_b,),
            in_specs=[
                pl.BlockSpec((bb, Hp), lambda i: (i, 0)),   # x: tiled over batch
                _const_spec((Hp, Mp)),                      # W_ug^T (resident)
                _const_spec((1, Mp)),                       # b_ug
                _const_spec((Mp, Hp)),                      # memory (resident)
                _const_spec((Hp, Hp)),                      # W_mc^T (resident)
                _const_spec((1, Hp)),                       # b_mc
            ],
            out_specs=pl.BlockSpec((bb, Hp), lambda i: (i, 0)),  # lane-dense output
        ),
        compiler_params=pltpu.CompilerParams(
            dimension_semantics=("parallel",),
            vmem_limit_bytes=vmem_limit,
        ),
        cost_estimate=cost,
    )(x, wug_p, bug_p, mem_p, wmc_p, bmc_p)

    return out_p if Bp == B else out_p[:B]


@functools.partial(jax.jit,
                   static_argnames=("block_b", "out_dtype", "single_buffer_weights"))
def memory_module_forward_padded(x_padded, params, *, block_b=4096, out_dtype=None,
                                 single_buffer_weights=False):
    """Forward on an already lane-dense (B, Hp) activation slab.

    Use this to keep activations in the padded layout across adjacent layers
    (no per-call pad of x and no [:B, :H] slice round-trips). Padded H columns
    of the output are exactly 0; rows beyond the real batch carry the
    zero-input forward value, so slice them at the network boundary only.
    block_b: 2048-4096 is a good default on v5e/v6e, up to ~8192 on v7x.
    """
    return _forward_padded_impl(x_padded, *params, block_b=block_b,
                                out_dtype=out_dtype,
                                single_buffer_weights=single_buffer_weights)


@functools.partial(jax.jit,
                   static_argnames=("block_b", "out_dtype", "single_buffer_weights"))
def memory_module_forward(x, params, *, block_b=4096, out_dtype=None,
                          single_buffer_weights=False):
    """Convenience wrapper: unpadded (B, H) in, unpadded (B, H) out."""
    wug_p = params[0]
    Hp = wug_p.shape[0]
    B, H = x.shape
    assert H <= Hp
    out_dtype = x.dtype if out_dtype is None else out_dtype
    xp = jnp.zeros((B, Hp), wug_p.dtype).at[:, :H].set(x.astype(wug_p.dtype))
    out_p = _forward_padded_impl(xp, *params, block_b=block_b, out_dtype=out_dtype,
                                 single_buffer_weights=single_buffer_weights)
    return out_p[:B, :H]


def _reference_forward(x, memory, w_ug, b_ug, w_mc, b_mc):
    uw = jax.nn.sigmoid(x @ w_ug.T + b_ug)
    mu = uw @ memory
    return jnp.tanh(mu @ w_mc.T + b_mc)


if __name__ == "__main__":
    hidden_size = 32
    memory_size = 10
    batch = 8

    key = jax.random.PRNGKey(0)
    k_x, k_mem, k_wug, k_bug, k_wmc, k_bmc = jax.random.split(key, 6)

    # Deterministic synthetic parameters in the PyTorch module's native layout.
    x = jax.random.normal(k_x, (batch, hidden_size), dtype=jnp.float32)
    memory = jax.random.normal(k_mem, (memory_size, hidden_size), dtype=jnp.float32)
    w_ug = jax.random.normal(k_wug, (memory_size, hidden_size), dtype=jnp.float32) * 0.1
    b_ug = jax.random.normal(k_bug, (memory_size,), dtype=jnp.float32) * 0.1
    w_mc = jax.random.normal(k_wmc, (hidden_size, hidden_size), dtype=jnp.float32) * 0.1
    b_mc = jax.random.normal(k_bmc, (hidden_size,), dtype=jnp.float32) * 0.1

    ref = _reference_forward(x, memory, w_ug, b_ug, w_mc, b_mc)

    # f32 MXU path: should match the pure-JAX reference tightly.
    params_f32 = prepare_memory_module_params(memory, w_ug, b_ug, w_mc, b_mc,
                                              compute_dtype=jnp.float32)
    out_f32 = jax.block_until_ready(memory_module_forward(x, params_f32))
    assert out_f32.shape == (batch, hidden_size)
    assert jnp.allclose(out_f32, ref, atol=1e-5, rtol=1e-5), "f32 path mismatch vs reference"

    # Default bf16-weight path (f32 accumulation, f32 controller input).
    params_bf16 = prepare_memory_module_params(memory, w_ug, b_ug, w_mc, b_mc)
    out_bf16 = jax.block_until_ready(memory_module_forward(x, params_bf16))
    assert out_bf16.shape == (batch, hidden_size)
    assert jnp.allclose(out_bf16, ref, atol=3e-2, rtol=3e-2), "bf16 path mismatch vs reference"

    # Padded-activation path (activations stay lane-dense across layers) with a
    # multi-tile grid (block_b=8 -> grid_b=3) and bf16 output writeback.
    batch2 = 24
    x2 = jax.random.normal(jax.random.PRNGKey(1), (batch2, hidden_size), dtype=jnp.float32)
    ref2 = _reference_forward(x2, memory, w_ug, b_ug, w_mc, b_mc)
    Hp = params_bf16[0].shape[0]
    x2_padded = jnp.zeros((batch2, Hp), jnp.bfloat16).at[:, :hidden_size].set(
        x2.astype(jnp.bfloat16))
    out2_padded = jax.block_until_ready(
        memory_module_forward_padded(x2_padded, params_bf16, block_b=8,
                                     out_dtype=jnp.bfloat16))
    assert out2_padded.shape == (batch2, Hp)
    out2 = out2_padded[:, :hidden_size].astype(jnp.float32)
    assert jnp.allclose(out2, ref2, atol=4e-2, rtol=4e-2), "padded/tiled path mismatch"

    print("KERNEL_OK")
</pallas_src>

<mosaic_0001>
module attributes {stable_mosaic.version = 11 : i64} {
  func.func @_memory_module_kernel(%arg0: i32, %arg1: memref<8x128xf32, #tpu.memory_space<vmem>>, %arg2: memref<128x128xf32, #tpu.memory_space<vmem>>, %arg3: memref<1x128xf32, #tpu.memory_space<vmem>>, %arg4: memref<128x128xf32, #tpu.memory_space<vmem>>, %arg5: memref<128x128xf32, #tpu.memory_space<vmem>>, %arg6: memref<1x128xf32, #tpu.memory_space<vmem>>, %arg7: memref<8x128xf32, #tpu.memory_space<vmem>>) attributes {dimension_semantics = [#tpu.dimension_semantics<parallel>], iteration_bounds = array<i64: 1>, scalar_prefetch = 0 : i64, scratch_operands = 0 : i64, tpu.core_type = #tpu.core_type<tc>, window_params = [{transform_indices = @transform_0, window_bounds = array<i64: 8, 128>}, {pipeline_mode = #tpu.pipeline_mode<synchronous>, transform_indices = @transform_1, window_bounds = array<i64: 128, 128>}, {pipeline_mode = #tpu.pipeline_mode<synchronous>, transform_indices = @transform_2, window_bounds = array<i64: 1, 128>}, {pipeline_mode = #tpu.pipeline_mode<synchronous>, transform_indices = @transform_3, window_bounds = array<i64: 128, 128>}, {pipeline_mode = #tpu.pipeline_mode<synchronous>, transform_indices = @transform_4, window_bounds = array<i64: 128, 128>}, {pipeline_mode = #tpu.pipeline_mode<synchronous>, transform_indices = @transform_5, window_bounds = array<i64: 1, 128>}, {transform_indices = @transform_6, window_bounds = array<i64: 8, 128>}]} {
    %c0 = arith.constant 0 : index
    %c0_0 = arith.constant 0 : index
    %0 = vector.load %arg1[%c0, %c0_0] : memref<8x128xf32, #tpu.memory_space<vmem>>, vector<8x128xf32>
    %c0_1 = arith.constant 0 : index
    %c0_2 = arith.constant 0 : index
    %1 = vector.load %arg2[%c0_1, %c0_2] : memref<128x128xf32, #tpu.memory_space<vmem>>, vector<128x128xf32>
    %cst = arith.constant dense<0.000000e+00> : vector<8x128xf32>
    %2 = tpu.matmul %0, %1, %cst {dimension_numbers = #tpu.dot_dimension_numbers<[1], [0], [0], [1], [0, 0, 1, 1], [], []>} : vector<8x128xf32>, vector<128x128xf32>, vector<8x128xf32> -> vector<8x128xf32>
    %c0_3 = arith.constant 0 : index
    %c0_4 = arith.constant 0 : index
    %3 = vector.load %arg3[%c0_3, %c0_4] : memref<1x128xf32, #tpu.memory_space<vmem>>, vector<1x128xf32>
    %4 = vector.broadcast %3 : vector<1x128xf32> to vector<8x128xf32>
    %5 = arith.addf %2, %4 : vector<8x128xf32>
    %cst_5 = arith.constant 5.000000e-01 : f32
    %6 = vector.broadcast %cst_5 : f32 to vector<8x128xf32>
    %7 = arith.mulf %6, %5 : vector<8x128xf32>
    %8 = math.tanh %7 : vector<8x128xf32>
    %cst_6 = arith.constant 1.000000e+00 : f32
    %9 = vector.broadcast %cst_6 : f32 to vector<8x128xf32>
    %10 = arith.addf %8, %9 : vector<8x128xf32>
    %cst_7 = arith.constant 5.000000e-01 : f32
    %11 = vector.broadcast %cst_7 : f32 to vector<8x128xf32>
    %12 = arith.mulf %11, %10 : vector<8x128xf32>
    %c0_8 = arith.constant 0 : index
    %c0_9 = arith.constant 0 : index
    %13 = vector.load %arg4[%c0_8, %c0_9] : memref<128x128xf32, #tpu.memory_space<vmem>>, vector<128x128xf32>
    %cst_10 = arith.constant dense<0.000000e+00> : vector<8x128xf32>
    %14 = tpu.matmul %12, %13, %cst_10 {dimension_numbers = #tpu.dot_dimension_numbers<[1], [0], [0], [1], [0, 0, 1, 1], [], []>} : vector<8x128xf32>, vector<128x128xf32>, vector<8x128xf32> -> vector<8x128xf32>
    %c0_11 = arith.constant 0 : index
    %c0_12 = arith.constant 0 : index
    %15 = vector.load %arg5[%c0_11, %c0_12] : memref<128x128xf32, #tpu.memory_space<vmem>>, vector<128x128xf32>
    %cst_13 = arith.constant dense<0.000000e+00> : vector<8x128xf32>
    %16 = tpu.matmul %14, %15, %cst_13 {dimension_numbers = #tpu.dot_dimension_numbers<[1], [0], [0], [1], [0, 0, 1, 1], [], []>} : vector<8x128xf32>, vector<128x128xf32>, vector<8x128xf32> -> vector<8x128xf32>
    %c0_14 = arith.constant 0 : index
    %c0_15 = arith.constant 0 : index
    %17 = vector.load %arg6[%c0_14, %c0_15] : memref<1x128xf32, #tpu.memory_space<vmem>>, vector<1x128xf32>
    %18 = vector.broadcast %17 : vector<1x128xf32> to vector<8x128xf32>
    %19 = arith.addf %16, %18 : vector<8x128xf32>
    %20 = math.tanh %19 : vector<8x128xf32>
    %c0_16 = arith.constant 0 : index
    %c0_17 = arith.constant 0 : index
    %21 = vector.load %arg7[%c0_16, %c0_17] : memref<8x128xf32, #tpu.memory_space<vmem>>, vector<8x128xf32>
    tpu.vector_store %arg7[%c0_16, %c0_17], %20 {strides = array<i32>} : memref<8x128xf32, #tpu.memory_space<vmem>>, vector<8x128xf32>,
    return
  }
  func.func @transform_0(%arg0: i32) -> (i32, i32) {
    %c0_i32 = arith.constant 0 : i32
    %c0_i32_0 = arith.constant 0 : i32
    return %arg0, %c0_i32 : i32, i32
  }
  func.func @transform_1(%arg0: i32) -> (i32, i32) {
    %c0_i32 = arith.constant 0 : i32
    %c0_i32_0 = arith.constant 0 : i32
    %c0_i32_1 = arith.constant 0 : i32
    return %c0_i32, %c0_i32_0 : i32, i32
  }
  func.func @transform_2(%arg0: i32) -> (i32, i32) {
    %c0_i32 = arith.constant 0 : i32
    %c0_i32_0 = arith.constant 0 : i32
    %c0_i32_1 = arith.constant 0 : i32
    return %c0_i32, %c0_i32_0 : i32, i32
  }
  func.func @transform_3(%arg0: i32) -> (i32, i32) {
    %c0_i32 = arith.constant 0 : i32
    %c0_i32_0 = arith.constant 0 : i32
    %c0_i32_1 = arith.constant 0 : i32
    return %c0_i32, %c0_i32_0 : i32, i32
  }
  func.func @transform_4(%arg0: i32) -> (i32, i32) {
    %c0_i32 = arith.constant 0 : i32
    %c0_i32_0 = arith.constant 0 : i32
    %c0_i32_1 = arith.constant 0 : i32
    return %c0_i32, %c0_i32_0 : i32, i32
  }
  func.func @transform_5(%arg0: i32) -> (i32, i32) {
    %c0_i32 = arith.constant 0 : i32
    %c0_i32_0 = arith.constant 0 : i32
    %c0_i32_1 = arith.constant 0 : i32
    return %c0_i32, %c0_i32_0 : i32, i32
  }
  func.func @transform_6(%arg0: i32) -> (i32, i32) {
    %c0_i32 = arith.constant 0 : i32
    %c0_i32_0 = arith.constant 0 : i32
    return %arg0, %c0_i32 : i32, i32
  }
}

</mosaic_0001>

<llo_original>
// kernel: memory_module_forward.1
$region0: #{memory_module_forward.1}
  #allocation0 [shape = 'u32[]', space=smem, size = 0x4, offset = 0x4, fixed_abs, tag = 'smem constant byte address 0x4 - core index']
  #allocation1 [shape = 'u32[72,128]{1,0:T(1,128)}', space=vmem, size = 0x9000, scoped, tag = 'internal scratch']
  %s0 = inlined_call_operand.vmem [shape: f32[8,128], index: 0, kind: input, shape index: {}]
  %s1 = inlined_call_operand.hbm [shape: f32[128,128], index: 1, kind: input, shape index: {}]
  %s2 = inlined_call_operand.vmem [shape: f32[1,128], index: 2, kind: input, shape index: {}]
  %s3 = inlined_call_operand.hbm [shape: f32[128,128], index: 3, kind: input, shape index: {}]
  %s4 = inlined_call_operand.hbm [shape: f32[128,128], index: 4, kind: input, shape index: {}]
  %s5 = inlined_call_operand.vmem [shape: f32[1,128], index: 5, kind: input, shape index: {}]
  %s6 = inlined_call_operand.hbm [shape: f32[8,128], index: 6, kind: output, shape index: {}]
  %s7 = sld [smem:[#allocation0]]
  $region46: #{memory_module_forward.1} parent=0
    _
  %s9 = ssub.s32 1, %s7
  %s10 = scalar_select 0, %s9, %s7
  $region1: #{memory_module_forward.1} parent=0
    #allocation2 [shape = 'u8[65536]{0}', space=vmem, size = 0x10000, scoped, tag = 'input window, operand 1, single buffered']
    #allocation3 [shape = 's32[1]{0}', space=sflag, size = 0x4, scoped, tag = 'scoped memory for memory_module_forward.1']
    #allocation4 [shape = 's32[1]{0}', space=sflag, size = 0x4, scoped, tag = 'scoped memory for memory_module_forward.1']
    #allocation5 [shape = 'u8[65536]{0}', space=vmem, size = 0x10000, scoped, tag = 'input window, operand 3, single buffered']
    #allocation6 [shape = 's32[1]{0}', space=sflag, size = 0x4, scoped, tag = 'scoped memory for memory_module_forward.1']
    #allocation7 [shape = 'u8[65536]{0}', space=vmem, size = 0x10000, scoped, tag = 'input window, operand 4, single buffered']
    #allocation8 [shape = 'u8[4096]{0}', space=vmem, size = 0x1000, scoped, tag = 'output window, operand 0, single buffered']
    %11 = vsyncpa [#allocation3], 0
    %12 = vsyncpa [#allocation6], 0
    %13 = vsyncpa [#allocation4], 0
    // Predicated region
    $region2: #{memory_module_forward.1} parent=1 // pred_check
      _
    $region3: #{memory_module_forward.1} parent=1 // pred_check_branch
      %15 = sbr.rel (0) target = $region5
    $region4: #{memory_module_forward.1} parent=1 // pred_region
      _
    $region5: #{memory_module_forward.1} parent=1 // pred_fallthru
      _
    // Predicated region
    $region6: #{memory_module_forward.1} parent=1 // pred_check
      _
    $region7: #{memory_module_forward.1} parent=1 // pred_check_branch
      %17 = sbr.rel (0) target = $region9
    $region8: #{memory_module_forward.1} parent=1 // pred_region
      %19 = vsyncadd [#allocation3], 0
      %s20 = sshll.u32 %s1, 4
      %s21 = int_to_ptr.hbm [resolvable:$true] %s20
      %s22 = sshll.u32 [#allocation2], 4
      %s23 = int_to_ptr.vmem [resolvable:$true] %s22
      %28 = dma.hbm_to_vmem [thread:$0]  %s21, 2048, %s23, [#allocation3], 128, 128, 8
    $region9: #{memory_module_forward.1} parent=1 // pred_fallthru
      _
    // Predicated region
    $region10: #{memory_module_forward.1} parent=1 // pred_check
      _
    $region11: #{memory_module_forward.1} parent=1 // pred_check_branch
      %30 = sbr.rel (0) target = $region13
    $region12: #{memory_module_forward.1} parent=1 // pred_region
      _
    $region13: #{memory_module_forward.1} parent=1 // pred_fallthru
      _
    // Predicated region
    $region14: #{memory_module_forward.1} parent=1 // pred_check
      _
    $region15: #{memory_module_forward.1} parent=1 // pred_check_branch
      %32 = sbr.rel (0) target = $region17
    $region16: #{memory_module_forward.1} parent=1 // pred_region
      %34 = vsyncadd [#allocation6], 0
      %s35 = sshll.u32 %s3, 4
      %s36 = int_to_ptr.hbm [resolvable:$true] %s35
      %s37 = sshll.u32 [#allocation5], 4
      %s38 = int_to_ptr.vmem [resolvable:$true] %s37
      %43 = dma.hbm_to_vmem [thread:$0]  %s36, 2048, %s38, [#allocation6], 128, 128, 8
    $region17: #{memory_module_forward.1} parent=1 // pred_fallthru
      _
    // Predicated region
    $region18: #{memory_module_forward.1} parent=1 // pred_check
      _
    $region19: #{memory_module_forward.1} parent=1 // pred_check_branch
      %45 = sbr.rel (0) target = $region21
    $region20: #{memory_module_forward.1} parent=1 // pred_region
      %47 = vsyncadd [#allocation6], 0
      %s48 = sshll.u32 %s4, 4
      %s49 = int_to_ptr.hbm [resolvable:$true] %s48
      %s50 = sshll.u32 [#allocation7], 4
      %s51 = int_to_ptr.vmem [resolvable:$true] %s50
      %56 = dma.hbm_to_vmem [thread:$0]  %s49, 2048, %s51, [#allocation6], 128, 128, 8
    $region21: #{memory_module_forward.1} parent=1 // pred_fallthru
      _
    // Predicated region
    $region22: #{memory_module_forward.1} parent=1 // pred_check
      _
    $region23: #{memory_module_forward.1} parent=1 // pred_check_branch
      %58 = sbr.rel (0) target = $region25
    $region24: #{memory_module_forward.1} parent=1 // pred_region
      _
    $region25: #{memory_module_forward.1} parent=1 // pred_fallthru
      _
    // Predicated region
    $region26: #{memory_module_forward.1} parent=1 // pred_check
      _
    $region27: #{memory_module_forward.1} parent=1 // pred_check_branch
      %60 = sbr.rel (0) target = $region29
    $region28: #{memory_module_forward.1} parent=1 // pred_region
      %62 = dma.done [#allocation3], 2048
    $region29: #{memory_module_forward.1} parent=1 // pred_fallthru
      _
    // Predicated region
    $region30: #{memory_module_forward.1} parent=1 // pred_check
      _
    $region31: #{memory_module_forward.1} parent=1 // pred_check_branch
      %64 = sbr.rel (0) target = $region33
    $region32: #{memory_module_forward.1} parent=1 // pred_region
      %66 = dma.done [#allocation6], 2048
    $region33: #{memory_module_forward.1} parent=1 // pred_fallthru
      _
    // Predicated region
    $region34: #{memory_module_forward.1} parent=1 // pred_check
      _
    $region35: #{memory_module_forward.1} parent=1 // pred_check_branch
      %68 = sbr.rel (0) target = $region37
    $region36: #{memory_module_forward.1} parent=1 // pred_region
      %70 = dma.done [#allocation6], 2048
    $region37: #{memory_module_forward.1} parent=1 // pred_fallthru
      _
    %v71 = vld [vmem:[%s0] sm:$0xff]
    %v72 = vld [vmem:[#allocation2] sm:$0xff]
    %v73 = vld [vmem:[#allocation2 + $0x8] sm:$0xff]
    %v74 = vld [vmem:[#allocation2 + $0x10] sm:$0xff]
    %v75 = vld [vmem:[#allocation2 + $0x18] sm:$0xff]
    %v76 = vld [vmem:[#allocation2 + $0x20] sm:$0xff]
    %v77 = vld [vmem:[#allocation2 + $0x28] sm:$0xff]
    %v78 = vld [vmem:[#allocation2 + $0x30] sm:$0xff]
    %v79 = vld [vmem:[#allocation2 + $0x38] sm:$0xff]
    %v80 = vld [vmem:[#allocation2 + $0x40] sm:$0xff]
    %v81 = vld [vmem:[#allocation2 + $0x48] sm:$0xff]
    %v82 = vld [vmem:[#allocation2 + $0x50] sm:$0xff]
    %v83 = vld [vmem:[#allocation2 + $0x58] sm:$0xff]
    %v84 = vld [vmem:[#allocation2 + $0x60] sm:$0xff]
    %v85 = vld [vmem:[#allocation2 + $0x68] sm:$0xff]
    %v86 = vld [vmem:[#allocation2 + $0x70] sm:$0xff]
    %v87 = vld [vmem:[#allocation2 + $0x78] sm:$0xff]
    %v88 = vld [vmem:[%s2] sm:$0x1]
    %v90 = vperm.slane %v88, 0
    %92 = vmatpush.msra.mxu0 %v87
    %93 = vmatpush.msra.mxu0 %v86
    %94 = vmatpush.msra.mxu0 %v85
    %95 = vmatpush.msra.mxu0 %v84
    %96 = vmatpush.msra.mxu0 %v83
    %97 = vmatpush.msra.mxu0 %v82
    %98 = vmatpush.msra.mxu0 %v81
    %99 = vmatpush.msra.mxu0 %v80
    %100 = vmatpush.msra.mxu0 %v79
    %101 = vmatpush.msra.mxu0 %v78
    %102 = vmatpush.msra.mxu0 %v77
    %103 = vmatpush.msra.mxu0 %v76
    %104 = vmatpush.msra.mxu0 %v75
    %105 = vmatpush.msra.mxu0 %v74
    %106 = vmatpush.msra.mxu0 %v73
    %107 = vmatpush.msra.mxu0 %v72
    %108 = vmatmul.f32.gmra.mxu0 %v71
    %v109 = vpop.f32.mrf.mxu0
    %v110 = vadd.f32 %v90, %v109
    %111 = vdwg.mxu0
    %v112 = vmul.f32 %v110, 0.5
    %v113 = vtanh.pop %v112
    %v114 = vadd.f32 %v113, 1.0
    %v115 = vmul.f32 %v114, 0.5
    %v116 = vld [vmem:[#allocation5] sm:$0xff]
    %v117 = vld [vmem:[#allocation5 + $0x8] sm:$0xff]
    %v118 = vld [vmem:[#allocation5 + $0x10] sm:$0xff]
    %v119 = vld [vmem:[#allocation5 + $0x18] sm:$0xff]
    %v120 = vld [vmem:[#allocation5 + $0x20] sm:$0xff]
    %v121 = vld [vmem:[#allocation5 + $0x28] sm:$0xff]
    %v122 = vld [vmem:[#allocation5 + $0x30] sm:$0xff]
    %v123 = vld [vmem:[#allocation5 + $0x38] sm:$0xff]
    %v124 = vld [vmem:[#allocation5 + $0x40] sm:$0xff]
    %v125 = vld [vmem:[#allocation5 + $0x48] sm:$0xff]
    %v126 = vld [vmem:[#allocation5 + $0x50] sm:$0xff]
    %v127 = vld [vmem:[#allocation5 + $0x58] sm:$0xff]
    %v128 = vld [vmem:[#allocation5 + $0x60] sm:$0xff]
    %v129 = vld [vmem:[#allocation5 + $0x68] sm:$0xff]
    %v130 = vld [vmem:[#allocation5 + $0x70] sm:$0xff]
    %v131 = vld [vmem:[#allocation5 + $0x78] sm:$0xff]
    %132 = vmatpush.msra.mxu0 %v131
    %133 = vmatpush.msra.mxu0 %v130
    %134 = vmatpush.msra.mxu0 %v129
    %135 = vmatpush.msra.mxu0 %v128
    %136 = vmatpush.msra.mxu0 %v127
    %137 = vmatpush.msra.mxu0 %v126
    %138 = vmatpush.msra.mxu0 %v125
    %139 = vmatpush.msra.mxu0 %v124
    %140 = vmatpush.msra.mxu0 %v123
    %141 = vmatpush.msra.mxu0 %v122
    %142 = vmatpush.msra.mxu0 %v121
    %143 = vmatpush.msra.mxu0 %v120
    %144 = vmatpush.msra.mxu0 %v119
    %145 = vmatpush.msra.mxu0 %v118
    %146 = vmatpush.msra.mxu0 %v117
    %147 = vmatpush.msra.mxu0 %v116
    %148 = vmatmul.f32.gmra.mxu0 %v115
    %v149 = vpop.f32.mrf.mxu0
    %v150 = vadd.f32 0.0, %v149
    %151 = vdwg.mxu0
    %v152 = vld [vmem:[#allocation7] sm:$0xff]
    %v153 = vld [vmem:[#allocation7 + $0x8] sm:$0xff]
    %v154 = vld [vmem:[#allocation7 + $0x10] sm:$0xff]
    %v155 = vld [vmem:[#allocation7 + $0x18] sm:$0xff]
    %v156 = vld [vmem:[#allocation7 + $0x20] sm:$0xff]
    %v157 = vld [vmem:[#allocation7 + $0x28] sm:$0xff]
    %v158 = vld [vmem:[#allocation7 + $0x30] sm:$0xff]
    %v159 = vld [vmem:[#allocation7 + $0x38] sm:$0xff]
    %v160 = vld [vmem:[#allocation7 + $0x40] sm:$0xff]
    %v161 = vld [vmem:[#allocation7 + $0x48] sm:$0xff]
    %v162 = vld [vmem:[#allocation7 + $0x50] sm:$0xff]
    %v163 = vld [vmem:[#allocation7 + $0x58] sm:$0xff]
    %v164 = vld [vmem:[#allocation7 + $0x60] sm:$0xff]
    %v165 = vld [vmem:[#allocation7 + $0x68] sm:$0xff]
    %v166 = vld [vmem:[#allocation7 + $0x70] sm:$0xff]
    %v167 = vld [vmem:[#allocation7 + $0x78] sm:$0xff]
    %v168 = vld [vmem:[%s5] sm:$0x1]
    %v170 = vperm.slane %v168, 0
    %172 = vmatpush.msra.mxu0 %v167
    %173 = vmatpush.msra.mxu0 %v166
    %174 = vmatpush.msra.mxu0 %v165
    %175 = vmatpush.msra.mxu0 %v164
    %176 = vmatpush.msra.mxu0 %v163
    %177 = vmatpush.msra.mxu0 %v162
    %178 = vmatpush.msra.mxu0 %v161
    %179 = vmatpush.msra.mxu0 %v160
    %180 = vmatpush.msra.mxu0 %v159
    %181 = vmatpush.msra.mxu0 %v158
    %182 = vmatpush.msra.mxu0 %v157
    %183 = vmatpush.msra.mxu0 %v156
    %184 = vmatpush.msra.mxu0 %v155
    %185 = vmatpush.msra.mxu0 %v154
    %186 = vmatpush.msra.mxu0 %v153
    %187 = vmatpush.msra.mxu0 %v152
    %188 = vmatmul.f32.gmra.mxu0 %v150
    %v189 = vpop.f32.mrf.mxu0
    %v190 = vadd.f32 %v170, %v189
    %191 = vdwg.mxu0
    %v192 = vtanh.pop %v190
    %193 = vst [vmem:[#allocation8] sm:$0xff] %v192
    // Predicated region
    $region38: #{memory_module_forward.1} parent=1 // pred_check
      _
    $region39: #{memory_module_forward.1} parent=1 // pred_check_branch
      %195 = sbr.rel (0) target = $region41
    $region40: #{memory_module_forward.1} parent=1 // pred_region
      %197 = vsyncadd [#allocation4], 0
      %s199 = sshll.u32 [#allocation8], 4
      %s200 = int_to_ptr.vmem [resolvable:$true] %s199
      %s201 = sshll.u32 %s6, 4
      %s202 = int_to_ptr.hbm [resolvable:$true] %s201
      %204 = dma.vmem_to_hbm [thread:$0]  %s200, 128, %s202, [#allocation4]
    $region41: #{memory_module_forward.1} parent=1 // pred_fallthru
      _
    // Predicated region
    $region42: #{memory_module_forward.1} parent=1 // pred_check
      _
    $region43: #{memory_module_forward.1} parent=1 // pred_check_branch
      %206 = sbr.rel (0) target = $region45
    $region44: #{memory_module_forward.1} parent=1 // pred_region
      %208 = dma.done [#allocation4], 128
    $region45: #{memory_module_forward.1} parent=1 // pred_fallthru
      _
    %209 = vsyncpa [#allocation3], 1
    %210 = vsyncpa [#allocation6], 1
    %211 = vsyncpa [#allocation4], 1

</llo_original>
